<compile_context>
chip_gen: v7x
topology: tpu7x:2x2x1
jax: 0.10.0
libtpu: 0.0.40
codegen_flags: <defaults>
</compile_context>

<pallas_src>
import jax
import jax.numpy as jnp
from jax.experimental import pallas as pl
from jax.experimental.pallas import tpu as pltpu


def _round_up(a: int, b: int) -> int:
    return (a + b - 1) // b * b


def _drop_path_scale_kernel(scale_ref, x_ref, o_ref):
    # scale_ref: (tb, 1) f32 per-sample scale (mask / keep_prob)
    # x_ref, o_ref: (tb, tn) activation block (lane-dense, tn multiple of 128)
    s = scale_ref[...].astype(x_ref.dtype)          # native-dtype multiply (bf16 stays bf16)
    o_ref[...] = (x_ref[...] * s).astype(o_ref.dtype)


def drop_path(x, drop_prob: float = 0.0, training: bool = False, key=None):
    """JAX/Pallas port of timm's drop_path (per-sample stochastic depth)."""
    if drop_prob == 0.0 or not training:
        return x
    keep_prob = 1.0 - float(drop_prob)
    if key is None:
        key = jax.random.PRNGKey(0)

    B = x.shape[0]
    N = 1
    for d in x.shape[1:]:
        N *= int(d)

    # --- per-sample scale, computed once in the wrapper (hoisted PRNG) -------
    u = jax.random.uniform(key, (B,), dtype=jnp.float32)
    mask = jnp.floor(jnp.float32(keep_prob) + u)          # Bernoulli(keep_prob) in {0, 1}
    scale = (mask * jnp.float32(1.0 / keep_prob))         # 0 or 1/keep_prob

    # --- lane-dense flat layout, padded to block multiples --------------------
    itemsize = jnp.dtype(x.dtype).itemsize
    tn = min(_round_up(N, 128), 32768)                    # lane-dense column block
    target_bytes = 2 * 1024 * 1024                        # ~2 MiB per input block
    rows = max(1, target_bytes // (tn * itemsize))
    tb = max(8, min(_round_up(B, 8), _round_up(rows, 8))) # sublane-aligned row block

    B_pad = _round_up(B, tb)
    N_pad = _round_up(N, tn)

    x2 = x.reshape(B, N)
    x2 = jnp.pad(x2, ((0, B_pad - B), (0, N_pad - N)))
    scale2 = jnp.pad(scale.reshape(B, 1), ((0, B_pad - B), (0, 0)))

    grid = (B_pad // tb, N_pad // tn)

    out = pl.pallas_call(
        _drop_path_scale_kernel,
        out_shape=jax.ShapeDtypeStruct((B_pad, N_pad), x.dtype),
        grid_spec=pltpu.PrefetchScalarGridSpec(
            num_scalar_prefetch=0,
            grid=grid,
            in_specs=[
                pl.BlockSpec((tb, 1), lambda i, j: (i, 0)),    # per-sample scale
                pl.BlockSpec((tb, tn), lambda i, j: (i, j)),   # activations
            ],
            out_specs=pl.BlockSpec((tb, tn), lambda i, j: (i, j)),
        ),
        compiler_params=pltpu.CompilerParams(
            dimension_semantics=("parallel", "parallel"),      # pure elementwise
        ),
    )(scale2, x2)

    return out[:B, :N].reshape(x.shape)


class DropPath:
    """JAX/Pallas port of the PyTorch DropPath module (stochastic depth)."""

    def __init__(self, drop_prob=None):
        self.drop_prob = 0.0 if drop_prob is None else float(drop_prob)
        self.training = True

    def __call__(self, x, key=None):
        return drop_path(x, self.drop_prob, self.training, key=key)


if __name__ == "__main__":
    root = jax.random.PRNGKey(0)
    k_data, k_drop = jax.random.split(root)

    # Small NCHW input consistent with a conv-net residual branch.
    x = jax.random.normal(k_data, (2, 4, 16, 16), dtype=jnp.float32)

    module = DropPath(drop_prob=0.25)
    module.training = True
    y_train = jax.block_until_ready(module(x, key=k_drop))
    assert y_train.shape == x.shape and y_train.dtype == x.dtype

    # Sanity: each sample is either zeroed or exactly x / keep_prob.
    keep_prob = 1.0 - module.drop_prob
    for b in range(x.shape[0]):
        yb = y_train[b]
        is_zero = bool(jnp.all(yb == 0.0))
        is_scaled = bool(jnp.allclose(yb, x[b] / keep_prob, atol=1e-6, rtol=1e-6))
        assert is_zero or is_scaled, "per-sample DropPath semantics violated"

    # Eval mode: identity (no kernel launch).
    module.training = False
    y_eval = jax.block_until_ready(module(x))
    assert bool(jnp.array_equal(y_eval, x))

    print("KERNEL_OK")
</pallas_src>

<mosaic_0001>
module attributes {stable_mosaic.version = 11 : i64} {
  func.func @_drop_path_scale_kernel(%arg0: i32, %arg1: i32, %arg2: memref<8x1xf32, #tpu.memory_space<vmem>>, %arg3: memref<8x1024xf32, #tpu.memory_space<vmem>>, %arg4: memref<8x1024xf32, #tpu.memory_space<vmem>>) attributes {dimension_semantics = [#tpu.dimension_semantics<parallel>, #tpu.dimension_semantics<parallel>], iteration_bounds = array<i64: 1, 1>, scalar_prefetch = 0 : i64, scratch_operands = 0 : i64, tpu.core_type = #tpu.core_type<tc>, window_params = [{transform_indices = @transform_0, window_bounds = array<i64: 8, 1>}, {transform_indices = @transform_1, window_bounds = array<i64: 8, 1024>}, {transform_indices = @transform_2, window_bounds = array<i64: 8, 1024>}]} {
    %c0 = arith.constant 0 : index
    %c0_0 = arith.constant 0 : index
    %0 = vector.load %arg2[%c0, %c0_0] : memref<8x1xf32, #tpu.memory_space<vmem>>, vector<8x1xf32>
    %c0_1 = arith.constant 0 : index
    %c0_2 = arith.constant 0 : index
    %1 = vector.load %arg3[%c0_1, %c0_2] : memref<8x1024xf32, #tpu.memory_space<vmem>>, vector<8x1024xf32>
    %2 = vector.broadcast %0 : vector<8x1xf32> to vector<8x1024xf32>
    %3 = arith.mulf %1, %2 : vector<8x1024xf32>
    %c0_3 = arith.constant 0 : index
    %c0_4 = arith.constant 0 : index
    %4 = vector.load %arg4[%c0_3, %c0_4] : memref<8x1024xf32, #tpu.memory_space<vmem>>, vector<8x1024xf32>
    tpu.vector_store %arg4[%c0_3, %c0_4], %3 {strides = array<i32>} : memref<8x1024xf32, #tpu.memory_space<vmem>>, vector<8x1024xf32>,
    return
  }
  func.func @transform_0(%arg0: i32, %arg1: i32) -> (i32, i32) {
    %c0_i32 = arith.constant 0 : i32
    %c0_i32_0 = arith.constant 0 : i32
    return %arg0, %c0_i32 : i32, i32
  }
  func.func @transform_1(%arg0: i32, %arg1: i32) -> (i32, i32) {
    %c0_i32 = arith.constant 0 : i32
    return %arg0, %arg1 : i32, i32
  }
  func.func @transform_2(%arg0: i32, %arg1: i32) -> (i32, i32) {
    %c0_i32 = arith.constant 0 : i32
    return %arg0, %arg1 : i32, i32
  }
}

</mosaic_0001>

<llo_original>
// kernel: tpu_custom_call.1
$region0: #{tpu_custom_call.1}
  #allocation0 [shape = 'u32[]', space=smem, size = 0x4, offset = 0x4, fixed_abs, tag = 'smem constant byte address 0x4 - core index']
  #allocation1 [shape = 'u32[144,128]{1,0:T(1,128)}', space=vmem, size = 0x12000, scoped, tag = 'internal scratch']
  %s0 = inlined_call_operand.vmem [shape: f32[8,1], index: 0, kind: input, shape index: {}]
  %s1 = inlined_call_operand.hbm [shape: f32[8,1024], index: 1, kind: input, shape index: {}]
  %s2 = inlined_call_operand.hbm [shape: f32[8,1024], index: 2, kind: output, shape index: {}]
  %s3 = sld [smem:[#allocation0]]
  $region22: #{tpu_custom_call.1} parent=0
    _
  %s5 = ssub.s32 1, %s3
  %s6 = scalar_select 0, %s5, %s3
  $region1: #{tpu_custom_call.1} parent=0
    #allocation2 [shape = 'u8[32768]{0}', space=vmem, size = 0x8000, scoped, tag = 'input window, operand 1, single buffered']
    #allocation3 [shape = 's32[1]{0}', space=sflag, size = 0x4, scoped, tag = 'scoped memory for tpu_custom_call.1']
    #allocation4 [shape = 's32[1]{0}', space=sflag, size = 0x4, scoped, tag = 'scoped memory for tpu_custom_call.1']
    #allocation5 [shape = 'u8[32768]{0}', space=vmem, size = 0x8000, scoped, tag = 'output window, operand 0, single buffered']
    %7 = vsyncpa [#allocation3], 0
    %8 = vsyncpa [#allocation4], 0
    // Predicated region
    $region2: #{tpu_custom_call.1} parent=1 // pred_check
      _
    $region3: #{tpu_custom_call.1} parent=1 // pred_check_branch
      %10 = sbr.rel (0) target = $region5
    $region4: #{tpu_custom_call.1} parent=1 // pred_region
      _
    $region5: #{tpu_custom_call.1} parent=1 // pred_fallthru
      _
    // Predicated region
    $region6: #{tpu_custom_call.1} parent=1 // pred_check
      _
    $region7: #{tpu_custom_call.1} parent=1 // pred_check_branch
      %12 = sbr.rel (0) target = $region9
    $region8: #{tpu_custom_call.1} parent=1 // pred_region
      %s14 = ssub.s32 1024, 1024
      %15 = vsyncadd [#allocation3], %s14
      %s17 = sshll.u32 [#allocation2], 4
      %s18 = int_to_ptr.vmem [resolvable:$true] %s17
      %20 = dma.hbm_to_vmem [thread:$0]  %s1, 1024, %s18, [#allocation3]
    $region9: #{tpu_custom_call.1} parent=1 // pred_fallthru
      _
    // Predicated region
    $region10: #{tpu_custom_call.1} parent=1 // pred_check
      _
    $region11: #{tpu_custom_call.1} parent=1 // pred_check_branch
      %22 = sbr.rel (0) target = $region13
    $region12: #{tpu_custom_call.1} parent=1 // pred_region
      %23 = dma.done [#allocation3], 1024
    $region13: #{tpu_custom_call.1} parent=1 // pred_fallthru
      _
    %v24 = vld [vmem:[%s0] sm:$0xff]
    %v25 = vld [vmem:[#allocation2] sm:$0xff]
    %v26 = vld [vmem:[#allocation2 + $0x8] sm:$0xff]
    %v27 = vld [vmem:[#allocation2 + $0x10] sm:$0xff]
    %v28 = vld [vmem:[#allocation2 + $0x18] sm:$0xff]
    %v29 = vld [vmem:[#allocation2 + $0x20] sm:$0xff]
    %v30 = vld [vmem:[#allocation2 + $0x28] sm:$0xff]
    %v31 = vld [vmem:[#allocation2 + $0x30] sm:$0xff]
    %v32 = vld [vmem:[#allocation2 + $0x38] sm:$0xff]
    %34 = vset.pattern.permute.xlu0 0
    %35 = vperm.xlu0 %34, %v24
    %v36 = vpop.permute.xlu0 %35
    %v38 = vmul.f32 %v25, %v36
    %v39 = vmul.f32 %v26, %v36
    %v40 = vmul.f32 %v27, %v36
    %v41 = vmul.f32 %v28, %v36
    %v42 = vmul.f32 %v29, %v36
    %v43 = vmul.f32 %v30, %v36
    %v44 = vmul.f32 %v31, %v36
    %v45 = vmul.f32 %v32, %v36
    %46 = vst [vmem:[#allocation5] sm:$0xff] %v38
    %47 = vst [vmem:[#allocation5 + $0x8] sm:$0xff] %v39
    %48 = vst [vmem:[#allocation5 + $0x10] sm:$0xff] %v40
    %49 = vst [vmem:[#allocation5 + $0x18] sm:$0xff] %v41
    %50 = vst [vmem:[#allocation5 + $0x20] sm:$0xff] %v42
    %51 = vst [vmem:[#allocation5 + $0x28] sm:$0xff] %v43
    %52 = vst [vmem:[#allocation5 + $0x30] sm:$0xff] %v44
    %53 = vst [vmem:[#allocation5 + $0x38] sm:$0xff] %v45
    // Predicated region
    $region14: #{tpu_custom_call.1} parent=1 // pred_check
      _
    $region15: #{tpu_custom_call.1} parent=1 // pred_check_branch
      %55 = sbr.rel (0) target = $region17
    $region16: #{tpu_custom_call.1} parent=1 // pred_region
      %s57 = ssub.s32 1024, 1024
      %58 = vsyncadd [#allocation4], %s57
      %s60 = sshll.u32 [#allocation5], 4
      %s61 = int_to_ptr.vmem [resolvable:$true] %s60
      %63 = dma.vmem_to_hbm [thread:$0]  %s61, 1024, %s2, [#allocation4]
    $region17: #{tpu_custom_call.1} parent=1 // pred_fallthru
      _
    // Predicated region
    $region18: #{tpu_custom_call.1} parent=1 // pred_check
      _
    $region19: #{tpu_custom_call.1} parent=1 // pred_check_branch
      %65 = sbr.rel (0) target = $region21
    $region20: #{tpu_custom_call.1} parent=1 // pred_region
      %66 = dma.done [#allocation4], 1024
    $region21: #{tpu_custom_call.1} parent=1 // pred_fallthru
      _
    %67 = vsyncpa [#allocation3], 1
    %68 = vsyncpa [#allocation4], 1

</llo_original>
